<compile_context>
chip_gen: v7x
topology: tpu7x:2x2x1
jax: 0.10.0
libtpu: 0.0.40
codegen_flags: <defaults>
</compile_context>

<pallas_src>
import jax
import jax.numpy as jnp
from jax import lax
from jax.experimental import pallas as pl
from jax.experimental.pallas import tpu as pltpu


THRESHOLD = 1.5
DECAY = 0.9

# Budget for the pipelined VMEM working set: 2 pipeline buffers x (input +
# output) per resident batch tile.  Kept conservative so the same tiling fits
# v7x's 64 MiB VMEM (32 MiB scoped default) as well as v5e/v6e.
_VMEM_BUDGET_BYTES = 24 * 1024 * 1024


def _lif_kernel(x_ref, out_ref):
    """One batch tile: run the full LIF time recurrence in-kernel.

    x_ref / out_ref: (TB, T, F).  Each timestep is a (TB, 1, F) sublane slice;
    the membrane potential is the fori_loop carry (kept in vregs).
    """
    tb, t_len, f = x_ref.shape
    mem0 = jnp.zeros((tb, 1, f), jnp.float32)

    def body(t, mem):
        x = x_ref[:, pl.ds(t, 1), :]                      # (TB, 1, F)
        mem = mem * DECAY + x.astype(jnp.float32)
        fired = mem >= THRESHOLD
        out_ref[:, pl.ds(t, 1), :] = jnp.where(fired, 1.0, 0.0).astype(out_ref.dtype)
        return jnp.where(fired, 0.0, mem)                 # reset-on-spike

    # Unroll so the LLO scheduler can co-issue loads/stores/VALU across steps.
    lax.fori_loop(0, t_len, body, mem0, unroll=min(t_len, 8))


def simple_snn_forward(inputs, *, block_b=None, out_dtype=jnp.float32):
    """inputs: (B, T, F) float32 -> spikes (B, T, F) `out_dtype`.

    `out_dtype` defaults to float32 to match the PyTorch interface; spikes are
    exactly 0/1, so bf16 output is a lossless bandwidth saving if desired.
    """
    B, T, F = inputs.shape

    if block_b is None:
        # Auto-size the batch tile so 2 buffers x (in + out) stay in budget.
        bytes_per_batch_row = 4 * T * F * jnp.dtype(jnp.float32).itemsize
        block_b = max(1, _VMEM_BUDGET_BYTES // max(bytes_per_batch_row, 1))
    block_b = min(block_b, B)

    spec = pl.BlockSpec((block_b, T, F), lambda b: (b, 0, 0))

    return pl.pallas_call(
        _lif_kernel,
        out_shape=jax.ShapeDtypeStruct((B, T, F), out_dtype),
        grid=(pl.cdiv(B, block_b),),
        in_specs=[spec],
        out_specs=spec,
        compiler_params=pltpu.CompilerParams(
            # Batch tiles are independent -> shardable across TCs on v7x,
            # neutral on v5e/v6e.  Time stays an in-kernel sequential loop.
            dimension_semantics=("parallel",),
        ),
    )(inputs)


def simple_snn_reference(inputs):
    """Pure-JAX reference mirroring the PyTorch loop."""
    B, T, F = inputs.shape
    mem = jnp.zeros((B, F), jnp.float32)
    outs = []
    for t in range(T):
        mem = mem * DECAY + inputs[:, t, :]
        spike = (mem >= THRESHOLD).astype(jnp.float32)
        mem = mem * (1.0 - spike)
        outs.append(spike[:, None, :])
    return jnp.concatenate(outs, axis=1)


if __name__ == "__main__":
    key = jax.random.PRNGKey(0)
    B, T, F = 16, 8, 128  # small demo shapes: batch, seq, features
    # Scale so some values cross the 1.5 threshold and the reset path is exercised.
    inputs = 2.0 * jax.random.normal(key, (B, T, F), dtype=jnp.float32)

    out = jax.block_until_ready(simple_snn_forward(inputs, block_b=8))
    ref = simple_snn_reference(inputs)

    assert out.shape == (B, T, F)
    assert out.dtype == jnp.float32
    assert jnp.allclose(out, ref), "Pallas output mismatch vs reference"
    print("KERNEL_OK")
</pallas_src>

<mosaic_0001>
module attributes {stable_mosaic.version = 11 : i64} {
  func.func @_lif_kernel(%arg0: i32, %arg1: memref<8x8x128xf32, #tpu.memory_space<vmem>>, %arg2: memref<8x8x128xf32, #tpu.memory_space<vmem>>) attributes {dimension_semantics = [#tpu.dimension_semantics<parallel>], iteration_bounds = array<i64: 2>, scalar_prefetch = 0 : i64, scratch_operands = 0 : i64, tpu.core_type = #tpu.core_type<tc>, window_params = [{transform_indices = @transform_0, window_bounds = array<i64: 8, 8, 128>}, {transform_indices = @transform_1, window_bounds = array<i64: 8, 8, 128>}]} {
    %cst = arith.constant 0.000000e+00 : f32
    %0 = vector.broadcast %cst : f32 to vector<8x1x128xf32>
    %c0_i32 = arith.constant 0 : i32
    %c0 = arith.constant 0 : index
    %1 = arith.index_cast %c0_i32 : i32 to index
    %c0_0 = arith.constant 0 : index
    %2 = vector.load %arg1[%c0, %1, %c0_0] : memref<8x8x128xf32, #tpu.memory_space<vmem>>, vector<8x1x128xf32>
    %cst_1 = arith.constant 0.899999976 : f32
    %3 = vector.broadcast %cst_1 : f32 to vector<8x1x128xf32>
    %4 = arith.mulf %0, %3 : vector<8x1x128xf32>
    %5 = arith.addf %4, %2 : vector<8x1x128xf32>
    %cst_2 = arith.constant 1.500000e+00 : f32
    %6 = vector.broadcast %cst_2 : f32 to vector<8x1x128xf32>
    %7 = arith.cmpf oge, %5, %6 : vector<8x1x128xf32>
    %cst_3 = arith.constant 1.000000e+00 : f32
    %cst_4 = arith.constant 0.000000e+00 : f32
    %8 = vector.broadcast %cst_3 : f32 to vector<8x1x128xf32>
    %9 = vector.broadcast %cst_4 : f32 to vector<8x1x128xf32>
    %10 = arith.select %7, %8, %9 : vector<8x1x128xi1>, vector<8x1x128xf32>
    %c0_5 = arith.constant 0 : index
    %11 = arith.index_cast %c0_i32 : i32 to index
    %c0_6 = arith.constant 0 : index
    %12 = vector.load %arg2[%c0_5, %11, %c0_6] : memref<8x8x128xf32, #tpu.memory_space<vmem>>, vector<8x1x128xf32>
    tpu.vector_store %arg2[%c0_5, %11, %c0_6], %10 {strides = array<i32>} : memref<8x8x128xf32, #tpu.memory_space<vmem>>, vector<8x1x128xf32>,
    %cst_7 = arith.constant 0.000000e+00 : f32
    %13 = vector.broadcast %cst_7 : f32 to vector<8x1x128xf32>
    %14 = arith.select %7, %13, %5 : vector<8x1x128xi1>, vector<8x1x128xf32>
    %c1_i32 = arith.constant 1 : i32
    %c0_8 = arith.constant 0 : index
    %15 = arith.index_cast %c1_i32 : i32 to index
    %c0_9 = arith.constant 0 : index
    %16 = vector.load %arg1[%c0_8, %15, %c0_9] : memref<8x8x128xf32, #tpu.memory_space<vmem>>, vector<8x1x128xf32>
    %cst_10 = arith.constant 0.899999976 : f32
    %17 = vector.broadcast %cst_10 : f32 to vector<8x1x128xf32>
    %18 = arith.mulf %14, %17 : vector<8x1x128xf32>
    %19 = arith.addf %18, %16 : vector<8x1x128xf32>
    %cst_11 = arith.constant 1.500000e+00 : f32
    %20 = vector.broadcast %cst_11 : f32 to vector<8x1x128xf32>
    %21 = arith.cmpf oge, %19, %20 : vector<8x1x128xf32>
    %cst_12 = arith.constant 1.000000e+00 : f32
    %cst_13 = arith.constant 0.000000e+00 : f32
    %22 = vector.broadcast %cst_12 : f32 to vector<8x1x128xf32>
    %23 = vector.broadcast %cst_13 : f32 to vector<8x1x128xf32>
    %24 = arith.select %21, %22, %23 : vector<8x1x128xi1>, vector<8x1x128xf32>
    %c0_14 = arith.constant 0 : index
    %25 = arith.index_cast %c1_i32 : i32 to index
    %c0_15 = arith.constant 0 : index
    %26 = vector.load %arg2[%c0_14, %25, %c0_15] : memref<8x8x128xf32, #tpu.memory_space<vmem>>, vector<8x1x128xf32>
    tpu.vector_store %arg2[%c0_14, %25, %c0_15], %24 {strides = array<i32>} : memref<8x8x128xf32, #tpu.memory_space<vmem>>, vector<8x1x128xf32>,
    %cst_16 = arith.constant 0.000000e+00 : f32
    %27 = vector.broadcast %cst_16 : f32 to vector<8x1x128xf32>
    %28 = arith.select %21, %27, %19 : vector<8x1x128xi1>, vector<8x1x128xf32>
    %c2_i32 = arith.constant 2 : i32
    %c0_17 = arith.constant 0 : index
    %29 = arith.index_cast %c2_i32 : i32 to index
    %c0_18 = arith.constant 0 : index
    %30 = vector.load %arg1[%c0_17, %29, %c0_18] : memref<8x8x128xf32, #tpu.memory_space<vmem>>, vector<8x1x128xf32>
    %cst_19 = arith.constant 0.899999976 : f32
    %31 = vector.broadcast %cst_19 : f32 to vector<8x1x128xf32>
    %32 = arith.mulf %28, %31 : vector<8x1x128xf32>
    %33 = arith.addf %32, %30 : vector<8x1x128xf32>
    %cst_20 = arith.constant 1.500000e+00 : f32
    %34 = vector.broadcast %cst_20 : f32 to vector<8x1x128xf32>
    %35 = arith.cmpf oge, %33, %34 : vector<8x1x128xf32>
    %cst_21 = arith.constant 1.000000e+00 : f32
    %cst_22 = arith.constant 0.000000e+00 : f32
    %36 = vector.broadcast %cst_21 : f32 to vector<8x1x128xf32>
    %37 = vector.broadcast %cst_22 : f32 to vector<8x1x128xf32>
    %38 = arith.select %35, %36, %37 : vector<8x1x128xi1>, vector<8x1x128xf32>
    %c0_23 = arith.constant 0 : index
    %39 = arith.index_cast %c2_i32 : i32 to index
    %c0_24 = arith.constant 0 : index
    %40 = vector.load %arg2[%c0_23, %39, %c0_24] : memref<8x8x128xf32, #tpu.memory_space<vmem>>, vector<8x1x128xf32>
    tpu.vector_store %arg2[%c0_23, %39, %c0_24], %38 {strides = array<i32>} : memref<8x8x128xf32, #tpu.memory_space<vmem>>, vector<8x1x128xf32>,
    %cst_25 = arith.constant 0.000000e+00 : f32
    %41 = vector.broadcast %cst_25 : f32 to vector<8x1x128xf32>
    %42 = arith.select %35, %41, %33 : vector<8x1x128xi1>, vector<8x1x128xf32>
    %c3_i32 = arith.constant 3 : i32
    %c0_26 = arith.constant 0 : index
    %43 = arith.index_cast %c3_i32 : i32 to index
    %c0_27 = arith.constant 0 : index
    %44 = vector.load %arg1[%c0_26, %43, %c0_27] : memref<8x8x128xf32, #tpu.memory_space<vmem>>, vector<8x1x128xf32>
    %cst_28 = arith.constant 0.899999976 : f32
    %45 = vector.broadcast %cst_28 : f32 to vector<8x1x128xf32>
    %46 = arith.mulf %42, %45 : vector<8x1x128xf32>
    %47 = arith.addf %46, %44 : vector<8x1x128xf32>
    %cst_29 = arith.constant 1.500000e+00 : f32
    %48 = vector.broadcast %cst_29 : f32 to vector<8x1x128xf32>
    %49 = arith.cmpf oge, %47, %48 : vector<8x1x128xf32>
    %cst_30 = arith.constant 1.000000e+00 : f32
    %cst_31 = arith.constant 0.000000e+00 : f32
    %50 = vector.broadcast %cst_30 : f32 to vector<8x1x128xf32>
    %51 = vector.broadcast %cst_31 : f32 to vector<8x1x128xf32>
    %52 = arith.select %49, %50, %51 : vector<8x1x128xi1>, vector<8x1x128xf32>
    %c0_32 = arith.constant 0 : index
    %53 = arith.index_cast %c3_i32 : i32 to index
    %c0_33 = arith.constant 0 : index
    %54 = vector.load %arg2[%c0_32, %53, %c0_33] : memref<8x8x128xf32, #tpu.memory_space<vmem>>, vector<8x1x128xf32>
    tpu.vector_store %arg2[%c0_32, %53, %c0_33], %52 {strides = array<i32>} : memref<8x8x128xf32, #tpu.memory_space<vmem>>, vector<8x1x128xf32>,
    %cst_34 = arith.constant 0.000000e+00 : f32
    %55 = vector.broadcast %cst_34 : f32 to vector<8x1x128xf32>
    %56 = arith.select %49, %55, %47 : vector<8x1x128xi1>, vector<8x1x128xf32>
    %c4_i32 = arith.constant 4 : i32
    %c0_35 = arith.constant 0 : index
    %57 = arith.index_cast %c4_i32 : i32 to index
    %c0_36 = arith.constant 0 : index
    %58 = vector.load %arg1[%c0_35, %57, %c0_36] : memref<8x8x128xf32, #tpu.memory_space<vmem>>, vector<8x1x128xf32>
    %cst_37 = arith.constant 0.899999976 : f32
    %59 = vector.broadcast %cst_37 : f32 to vector<8x1x128xf32>
    %60 = arith.mulf %56, %59 : vector<8x1x128xf32>
    %61 = arith.addf %60, %58 : vector<8x1x128xf32>
    %cst_38 = arith.constant 1.500000e+00 : f32
    %62 = vector.broadcast %cst_38 : f32 to vector<8x1x128xf32>
    %63 = arith.cmpf oge, %61, %62 : vector<8x1x128xf32>
    %cst_39 = arith.constant 1.000000e+00 : f32
    %cst_40 = arith.constant 0.000000e+00 : f32
    %64 = vector.broadcast %cst_39 : f32 to vector<8x1x128xf32>
    %65 = vector.broadcast %cst_40 : f32 to vector<8x1x128xf32>
    %66 = arith.select %63, %64, %65 : vector<8x1x128xi1>, vector<8x1x128xf32>
    %c0_41 = arith.constant 0 : index
    %67 = arith.index_cast %c4_i32 : i32 to index
    %c0_42 = arith.constant 0 : index
    %68 = vector.load %arg2[%c0_41, %67, %c0_42] : memref<8x8x128xf32, #tpu.memory_space<vmem>>, vector<8x1x128xf32>
    tpu.vector_store %arg2[%c0_41, %67, %c0_42], %66 {strides = array<i32>} : memref<8x8x128xf32, #tpu.memory_space<vmem>>, vector<8x1x128xf32>,
    %cst_43 = arith.constant 0.000000e+00 : f32
    %69 = vector.broadcast %cst_43 : f32 to vector<8x1x128xf32>
    %70 = arith.select %63, %69, %61 : vector<8x1x128xi1>, vector<8x1x128xf32>
    %c5_i32 = arith.constant 5 : i32
    %c0_44 = arith.constant 0 : index
    %71 = arith.index_cast %c5_i32 : i32 to index
    %c0_45 = arith.constant 0 : index
    %72 = vector.load %arg1[%c0_44, %71, %c0_45] : memref<8x8x128xf32, #tpu.memory_space<vmem>>, vector<8x1x128xf32>
    %cst_46 = arith.constant 0.899999976 : f32
    %73 = vector.broadcast %cst_46 : f32 to vector<8x1x128xf32>
    %74 = arith.mulf %70, %73 : vector<8x1x128xf32>
    %75 = arith.addf %74, %72 : vector<8x1x128xf32>
    %cst_47 = arith.constant 1.500000e+00 : f32
    %76 = vector.broadcast %cst_47 : f32 to vector<8x1x128xf32>
    %77 = arith.cmpf oge, %75, %76 : vector<8x1x128xf32>
    %cst_48 = arith.constant 1.000000e+00 : f32
    %cst_49 = arith.constant 0.000000e+00 : f32
    %78 = vector.broadcast %cst_48 : f32 to vector<8x1x128xf32>
    %79 = vector.broadcast %cst_49 : f32 to vector<8x1x128xf32>
    %80 = arith.select %77, %78, %79 : vector<8x1x128xi1>, vector<8x1x128xf32>
    %c0_50 = arith.constant 0 : index
    %81 = arith.index_cast %c5_i32 : i32 to index
    %c0_51 = arith.constant 0 : index
    %82 = vector.load %arg2[%c0_50, %81, %c0_51] : memref<8x8x128xf32, #tpu.memory_space<vmem>>, vector<8x1x128xf32>
    tpu.vector_store %arg2[%c0_50, %81, %c0_51], %80 {strides = array<i32>} : memref<8x8x128xf32, #tpu.memory_space<vmem>>, vector<8x1x128xf32>,
    %cst_52 = arith.constant 0.000000e+00 : f32
    %83 = vector.broadcast %cst_52 : f32 to vector<8x1x128xf32>
    %84 = arith.select %77, %83, %75 : vector<8x1x128xi1>, vector<8x1x128xf32>
    %c6_i32 = arith.constant 6 : i32
    %c0_53 = arith.constant 0 : index
    %85 = arith.index_cast %c6_i32 : i32 to index
    %c0_54 = arith.constant 0 : index
    %86 = vector.load %arg1[%c0_53, %85, %c0_54] : memref<8x8x128xf32, #tpu.memory_space<vmem>>, vector<8x1x128xf32>
    %cst_55 = arith.constant 0.899999976 : f32
    %87 = vector.broadcast %cst_55 : f32 to vector<8x1x128xf32>
    %88 = arith.mulf %84, %87 : vector<8x1x128xf32>
    %89 = arith.addf %88, %86 : vector<8x1x128xf32>
    %cst_56 = arith.constant 1.500000e+00 : f32
    %90 = vector.broadcast %cst_56 : f32 to vector<8x1x128xf32>
    %91 = arith.cmpf oge, %89, %90 : vector<8x1x128xf32>
    %cst_57 = arith.constant 1.000000e+00 : f32
    %cst_58 = arith.constant 0.000000e+00 : f32
    %92 = vector.broadcast %cst_57 : f32 to vector<8x1x128xf32>
    %93 = vector.broadcast %cst_58 : f32 to vector<8x1x128xf32>
    %94 = arith.select %91, %92, %93 : vector<8x1x128xi1>, vector<8x1x128xf32>
    %c0_59 = arith.constant 0 : index
    %95 = arith.index_cast %c6_i32 : i32 to index
    %c0_60 = arith.constant 0 : index
    %96 = vector.load %arg2[%c0_59, %95, %c0_60] : memref<8x8x128xf32, #tpu.memory_space<vmem>>, vector<8x1x128xf32>
    tpu.vector_store %arg2[%c0_59, %95, %c0_60], %94 {strides = array<i32>} : memref<8x8x128xf32, #tpu.memory_space<vmem>>, vector<8x1x128xf32>,
    %cst_61 = arith.constant 0.000000e+00 : f32
    %97 = vector.broadcast %cst_61 : f32 to vector<8x1x128xf32>
    %98 = arith.select %91, %97, %89 : vector<8x1x128xi1>, vector<8x1x128xf32>
    %c7_i32 = arith.constant 7 : i32
    %c0_62 = arith.constant 0 : index
    %99 = arith.index_cast %c7_i32 : i32 to index
    %c0_63 = arith.constant 0 : index
    %100 = vector.load %arg1[%c0_62, %99, %c0_63] : memref<8x8x128xf32, #tpu.memory_space<vmem>>, vector<8x1x128xf32>
    %cst_64 = arith.constant 0.899999976 : f32
    %101 = vector.broadcast %cst_64 : f32 to vector<8x1x128xf32>
    %102 = arith.mulf %98, %101 : vector<8x1x128xf32>
    %103 = arith.addf %102, %100 : vector<8x1x128xf32>
    %cst_65 = arith.constant 1.500000e+00 : f32
    %104 = vector.broadcast %cst_65 : f32 to vector<8x1x128xf32>
    %105 = arith.cmpf oge, %103, %104 : vector<8x1x128xf32>
    %cst_66 = arith.constant 1.000000e+00 : f32
    %cst_67 = arith.constant 0.000000e+00 : f32
    %106 = vector.broadcast %cst_66 : f32 to vector<8x1x128xf32>
    %107 = vector.broadcast %cst_67 : f32 to vector<8x1x128xf32>
    %108 = arith.select %105, %106, %107 : vector<8x1x128xi1>, vector<8x1x128xf32>
    %c0_68 = arith.constant 0 : index
    %109 = arith.index_cast %c7_i32 : i32 to index
    %c0_69 = arith.constant 0 : index
    %110 = vector.load %arg2[%c0_68, %109, %c0_69] : memref<8x8x128xf32, #tpu.memory_space<vmem>>, vector<8x1x128xf32>
    tpu.vector_store %arg2[%c0_68, %109, %c0_69], %108 {strides = array<i32>} : memref<8x8x128xf32, #tpu.memory_space<vmem>>, vector<8x1x128xf32>,
    %cst_70 = arith.constant 0.000000e+00 : f32
    %111 = vector.broadcast %cst_70 : f32 to vector<8x1x128xf32>
    %112 = arith.select %105, %111, %103 : vector<8x1x128xi1>, vector<8x1x128xf32>
    %c8_i32 = arith.constant 8 : i32
    return
  }
  func.func @transform_0(%arg0: i32) -> (i32, i32, i32) {
    %c0_i32 = arith.constant 0 : i32
    %c0_i32_0 = arith.constant 0 : i32
    %c0_i32_1 = arith.constant 0 : i32
    return %arg0, %c0_i32, %c0_i32_0 : i32, i32, i32
  }
  func.func @transform_1(%arg0: i32) -> (i32, i32, i32) {
    %c0_i32 = arith.constant 0 : i32
    %c0_i32_0 = arith.constant 0 : i32
    %c0_i32_1 = arith.constant 0 : i32
    return %arg0, %c0_i32, %c0_i32_0 : i32, i32, i32
  }
}

</mosaic_0001>

<llo_original>
// kernel: tpu_custom_call.1
$region0: #{tpu_custom_call.1}
  #allocation0 [shape = 'u32[]', space=smem, size = 0x4, offset = 0x4, fixed_abs, tag = 'smem constant byte address 0x4 - core index']
  #allocation1 [shape = 'u32[144,128]{1,0:T(1,128)}', space=vmem, size = 0x12000, scoped, tag = 'internal scratch']
  %s0 = inlined_call_operand.hbm [shape: f32[16,8,128], index: 0, kind: input, shape index: {}]
  %s1 = inlined_call_operand.hbm [shape: f32[16,8,128], index: 1, kind: output, shape index: {}]
  %s2 = sld [smem:[#allocation0]]
  $region41: #{tpu_custom_call.1} parent=0
    _
  %s4 = ssub.s32 1, %s2
  %s5 = scalar_select 0, %s4, %s2
  $region1: #{tpu_custom_call.1} parent=0
    #allocation2 [shape = 'u8[65536]{0}', space=vmem, size = 0x10000, scoped, tag = 'input window, operand 0']
    #allocation3 [shape = 's32[2]{0}', space=sflag, size = 0x8, scoped, tag = 'scoped memory for tpu_custom_call.1']
    #allocation4 [shape = 's32[2]{0}', space=sflag, size = 0x8, scoped, tag = 'scoped memory for tpu_custom_call.1']
    #allocation5 [shape = 'u8[65536]{0}', space=vmem, size = 0x10000, scoped, tag = 'output window, operand 0']
    %6 = vsyncpa [#allocation3], 0
    %s7 = scalar_lea.sflag [#allocation3], 1
    %8 = vsyncpa %s7, 0
    %9 = vsyncpa [#allocation4], 0
    %s10 = scalar_lea.sflag [#allocation4], 1
    %11 = vsyncpa %s10, 0
    loop: start=0, step=1, limit=4
    $region2: #{tpu_custom_call.1} parent=1 // loop_pre_header
      _
    $region3: #{tpu_custom_call.1} parent=1 // loop_header
      %s13 = sphi 0, %s17
      %p14 = scmp.ge.s32.totalorder %s13, 4
      %s23 = sphi 0, %s25
      %s26 = sphi 0, %s23
      %s27 = sphi 0, %s26
      %s43 = sphi 0, %s27
      %s49 = sphi 0, %s51
      %s52 = sphi 0, %s49
      %s53 = sphi 0, %s52
      %s69 = sphi 0, %s53
    $region4: #{tpu_custom_call.1} parent=1 // loop_header_branch
      %16 = sbr.rel (%p14) target = $region8
    $region5: #{tpu_custom_call.1} parent=1 // loop_body
      %s18 = ssub.s32 %s13, 1
      %s19 = ssub.s32 %s13, 2
      %s20 = sadd.s32 %s13, 1
      %s21 = ssub.s32 %s13, %s20
      %p22 = scmp.eq.s32.totalorder %s21, 0
      %s24 = sadd.s32 %s23, 1
      %s25 = scalar_select %p22, %s23, %s24
      %p28 = pneg %p22
      %p29 = scmp.eq.s32.totalorder %s13, 1
      %p30 = por %p28, %p29
      %p31 = scmp.ne.s32.totalorder %s23, %s26
      %p32 = scmp.eq.s32.totalorder %s13, 0
      %p33 = por %p31, %p32
      %p34 = scmp.ne.s32.totalorder %s23, %s26
      %p35 = scmp.eq.s32.totalorder %s18, 1
      %p36 = por %p34, %p35
      %p37 = scmp.ne.s32.totalorder %s26, %s27
      %p38 = scmp.eq.s32.totalorder %s18, 0
      %p39 = por %p37, %p38
      %p40 = scmp.ne.s32.totalorder %s26, %s27
      %p41 = scmp.eq.s32.totalorder %s19, 1
      %p42 = por %p40, %p41
      %p44 = scmp.ne.s32.totalorder %s27, %s43
      %p45 = scmp.eq.s32.totalorder %s19, 0
      %p46 = por %p44, %p45
      %s47 = ssub.s32 %s13, %s20
      %p48 = scmp.eq.s32.totalorder %s47, 0
      %s50 = sadd.s32 %s49, 1
      %s51 = scalar_select %p48, %s49, %s50
      %p54 = pneg %p48
      %p55 = scmp.eq.s32.totalorder %s13, 1
      %p56 = por %p54, %p55
      %p57 = scmp.ne.s32.totalorder %s49, %s52
      %p58 = scmp.eq.s32.totalorder %s13, 0
      %p59 = por %p57, %p58
      %p60 = scmp.ne.s32.totalorder %s49, %s52
      %p61 = scmp.eq.s32.totalorder %s18, 1
      %p62 = por %p60, %p61
      %p63 = scmp.ne.s32.totalorder %s52, %s53
      %p64 = scmp.eq.s32.totalorder %s18, 0
      %p65 = por %p63, %p64
      %p66 = scmp.ne.s32.totalorder %s52, %s53
      %p67 = scmp.eq.s32.totalorder %s19, 1
      %p68 = por %p66, %p67
      %p70 = scmp.ne.s32.totalorder %s53, %s69
      %p71 = scmp.eq.s32.totalorder %s19, 0
      %p72 = por %p70, %p71
      %p73 = scmp.le.s32.totalorder 1, %s13
      %p74 = scmp.lt.s32.totalorder %s13, 3
      %p75 = pnand %p73, %p74
      %p76 = pneg %p75
      // Predicated region
      $region9: #{tpu_custom_call.1} parent=5 // pred_check
        _
      $region10: #{tpu_custom_call.1} parent=5 // pred_check_branch
        %78 = sbr.rel (%p75) target = $region12
      $region11: #{tpu_custom_call.1} parent=5 // pred_region
        %s79 = ssub.s32 %s13, 1
      $region12: #{tpu_custom_call.1} parent=5 // pred_fallthru
        _
      %p80 = scmp.lt.s32.totalorder %s13, 2
      // Predicated region
      $region13: #{tpu_custom_call.1} parent=5 // pred_check
        %p81 = pneg %p80
      $region14: #{tpu_custom_call.1} parent=5 // pred_check_branch
        %83 = sbr.rel (%p81) target = $region16
      $region15: #{tpu_custom_call.1} parent=5 // pred_region
        // Predicated region
        $region17: #{tpu_custom_call.1} parent=15 // pred_check
          %p84 = pneg %p33
        $region18: #{tpu_custom_call.1} parent=15 // pred_check_branch
          %86 = sbr.rel (%p84) target = $region20
        $region19: #{tpu_custom_call.1} parent=15 // pred_region
          %s87 = sand.u32 %s23, 1
          %s88 = scalar_lea.sflag [#allocation3], %s87
          %s89 = sand.u32 %s23, 1
          %s90 = smul.addr %s89, 64
          %s91 = scalar_lea.vmem [#allocation2], %s90
          %s92 = smul.u32 8, %s13
          %s94 = ssub.s32 1024, 1024
          %95 = vsyncadd %s88, %s94
          %s96 = smul.addr %s92, 128
          %s97 = scalar_lea.hbm %s0, %s96
          %s98 = sshll.u32 %s91, 4
          %s99 = int_to_ptr.vmem [resolvable:$true] %s98
          %104 = dma.hbm_to_vmem [thread:$0]  %s97, 1024, %s99, %s88, 128, 128, 8
        $region20: #{tpu_custom_call.1} parent=15 // pred_fallthru
          _
      $region16: #{tpu_custom_call.1} parent=5 // pred_fallthru
        _
      %p105 = scmp.le.s32.totalorder 1, %s13
      %p106 = scmp.lt.s32.totalorder %s13, 3
      %p107 = pnand %p105, %p106
      %p108 = pneg %p107
      // Predicated region
      $region21: #{tpu_custom_call.1} parent=5 // pred_check
        _
      $region22: #{tpu_custom_call.1} parent=5 // pred_check_branch
        %110 = sbr.rel (%p107) target = $region24
      $region23: #{tpu_custom_call.1} parent=5 // pred_region
        %s111 = ssub.s32 %s13, 1
        %s112 = sand.u32 %s26, 1
        %s113 = scalar_lea.sflag [#allocation3], %s112
        %s114 = sand.u32 %s26, 1
        %s115 = smul.addr %s114, 64
        %s116 = scalar_lea.vmem [#allocation2], %s115
        // Predicated region
        $region25: #{tpu_custom_call.1} parent=23 // pred_check
          %p117 = pneg %p39
        $region26: #{tpu_custom_call.1} parent=23 // pred_check_branch
          %119 = sbr.rel (%p117) target = $region28
        $region27: #{tpu_custom_call.1} parent=23 // pred_region
          %120 = dma.done %s113, 1024
        $region28: #{tpu_custom_call.1} parent=23 // pred_fallthru
          _
        %s121 = sand.u32 %s26, 1
        %s122 = scalar_lea.sflag [#allocation3], %s121
        %s123 = sand.u32 %s26, 1
        %s124 = smul.addr %s123, 64
        %s125 = scalar_lea.vmem [#allocation2], %s124
        %p126 = pneg %p39
        %p127 = pneg %p36
        %p128 = pneg %p65
        %p129 = pneg %p62
        %s130 = sand.u32 %s52, 1
        %s131 = scalar_lea.sflag [#allocation4], %s130
        %s132 = sand.u32 %s52, 1
        %s133 = smul.addr %s132, 64
        %s134 = scalar_lea.vmem [#allocation5], %s133
        %s135 = smul.u32 8, %s18
        %s136 = smul.u32 8, %s18
        %v137 = vld [vmem:[%s116] sm:$0x1]
        %v138 = vld [vmem:[%s116 + $0x8] sm:$0x1]
        %v139 = vld [vmem:[%s116 + $0x10] sm:$0x1]
        %v140 = vld [vmem:[%s116 + $0x18] sm:$0x1]
        %v141 = vld [vmem:[%s116 + $0x20] sm:$0x1]
        %v142 = vld [vmem:[%s116 + $0x28] sm:$0x1]
        %v143 = vld [vmem:[%s116 + $0x30] sm:$0x1]
        %v144 = vld [vmem:[%s116 + $0x38] sm:$0x1]
        %v145 = vadd.f32 %v137, 0.0
        %v146 = vadd.f32 %v138, 0.0
        %v147 = vadd.f32 %v139, 0.0
        %v148 = vadd.f32 %v140, 0.0
        %v149 = vadd.f32 %v141, 0.0
        %v150 = vadd.f32 %v142, 0.0
        %v151 = vadd.f32 %v143, 0.0
        %v152 = vadd.f32 %v144, 0.0
        %vm153 = vcmp.ge.f32.partialorder %v145, 1.5
        %vm154 = vcmp.ge.f32.partialorder %v146, 1.5
        %vm155 = vcmp.ge.f32.partialorder %v147, 1.5
        %vm156 = vcmp.ge.f32.partialorder %v148, 1.5
        %vm157 = vcmp.ge.f32.partialorder %v149, 1.5
        %vm158 = vcmp.ge.f32.partialorder %v150, 1.5
        %vm159 = vcmp.ge.f32.partialorder %v151, 1.5
        %vm160 = vcmp.ge.f32.partialorder %v152, 1.5
        %v161 = vsel %vm153, 1.0, 0.0
        %v162 = vsel %vm154, 1.0, 0.0
        %v163 = vsel %vm155, 1.0, 0.0
        %v164 = vsel %vm156, 1.0, 0.0
        %v165 = vsel %vm157, 1.0, 0.0
        %v166 = vsel %vm158, 1.0, 0.0
        %v167 = vsel %vm159, 1.0, 0.0
        %v168 = vsel %vm160, 1.0, 0.0
        %169 = vst [vmem:[%s134] sm:$0x1] %v161
        %170 = vst [vmem:[%s134 + $0x8] sm:$0x1] %v162
        %171 = vst [vmem:[%s134 + $0x10] sm:$0x1] %v163
        %172 = vst [vmem:[%s134 + $0x18] sm:$0x1] %v164
        %173 = vst [vmem:[%s134 + $0x20] sm:$0x1] %v165
        %174 = vst [vmem:[%s134 + $0x28] sm:$0x1] %v166
        %175 = vst [vmem:[%s134 + $0x30] sm:$0x1] %v167
        %176 = vst [vmem:[%s134 + $0x38] sm:$0x1] %v168
        %v177 = vsel %vm153, 0.0, %v145
        %v178 = vsel %vm154, 0.0, %v146
        %v179 = vsel %vm155, 0.0, %v147
        %v180 = vsel %vm156, 0.0, %v148
        %v181 = vsel %vm157, 0.0, %v149
        %v182 = vsel %vm158, 0.0, %v150
        %v183 = vsel %vm159, 0.0, %v151
        %v184 = vsel %vm160, 0.0, %v152
        %v185 = vld [vmem:[%s116 + $0x1] sm:$0x1]
        %v186 = vld [vmem:[%s116 + $0x9] sm:$0x1]
        %v187 = vld [vmem:[%s116 + $0x11] sm:$0x1]
        %v188 = vld [vmem:[%s116 + $0x19] sm:$0x1]
        %v189 = vld [vmem:[%s116 + $0x21] sm:$0x1]
        %v190 = vld [vmem:[%s116 + $0x29] sm:$0x1]
        %v191 = vld [vmem:[%s116 + $0x31] sm:$0x1]
        %v192 = vld [vmem:[%s116 + $0x39] sm:$0x1]
        %v193 = vmul.f32 %v177, 0.9
        %v194 = vmul.f32 %v178, 0.9
        %v195 = vmul.f32 %v179, 0.9
        %v196 = vmul.f32 %v180, 0.9
        %v197 = vmul.f32 %v181, 0.9
        %v198 = vmul.f32 %v182, 0.9
        %v199 = vmul.f32 %v183, 0.9
        %v200 = vmul.f32 %v184, 0.9
        %v201 = vadd.f32 %v193, %v185
        %v202 = vadd.f32 %v194, %v186
        %v203 = vadd.f32 %v195, %v187
        %v204 = vadd.f32 %v196, %v188
        %v205 = vadd.f32 %v197, %v189
        %v206 = vadd.f32 %v198, %v190
        %v207 = vadd.f32 %v199, %v191
        %v208 = vadd.f32 %v200, %v192
        %vm209 = vcmp.ge.f32.partialorder %v201, 1.5
        %vm210 = vcmp.ge.f32.partialorder %v202, 1.5
        %vm211 = vcmp.ge.f32.partialorder %v203, 1.5
        %vm212 = vcmp.ge.f32.partialorder %v204, 1.5
        %vm213 = vcmp.ge.f32.partialorder %v205, 1.5
        %vm214 = vcmp.ge.f32.partialorder %v206, 1.5
        %vm215 = vcmp.ge.f32.partialorder %v207, 1.5
        %vm216 = vcmp.ge.f32.partialorder %v208, 1.5
        %v217 = vsel %vm209, 1.0, 0.0
        %v218 = vsel %vm210, 1.0, 0.0
        %v219 = vsel %vm211, 1.0, 0.0
        %v220 = vsel %vm212, 1.0, 0.0
        %v221 = vsel %vm213, 1.0, 0.0
        %v222 = vsel %vm214, 1.0, 0.0
        %v223 = vsel %vm215, 1.0, 0.0
        %v224 = vsel %vm216, 1.0, 0.0
        %225 = vst [vmem:[%s134 + $0x1] sm:$0x1] %v217
        %226 = vst [vmem:[%s134 + $0x9] sm:$0x1] %v218
        %227 = vst [vmem:[%s134 + $0x11] sm:$0x1] %v219
        %228 = vst [vmem:[%s134 + $0x19] sm:$0x1] %v220
        %229 = vst [vmem:[%s134 + $0x21] sm:$0x1] %v221
        %230 = vst [vmem:[%s134 + $0x29] sm:$0x1] %v222
        %231 = vst [vmem:[%s134 + $0x31] sm:$0x1] %v223
        %232 = vst [vmem:[%s134 + $0x39] sm:$0x1] %v224
        %v233 = vsel %vm209, 0.0, %v201
        %v234 = vsel %vm210, 0.0, %v202
        %v235 = vsel %vm211, 0.0, %v203
        %v236 = vsel %vm212, 0.0, %v204
        %v237 = vsel %vm213, 0.0, %v205
        %v238 = vsel %vm214, 0.0, %v206
        %v239 = vsel %vm215, 0.0, %v207
        %v240 = vsel %vm216, 0.0, %v208
        %v241 = vld [vmem:[%s116 + $0x2] sm:$0x1]
        %v242 = vld [vmem:[%s116 + $0xa] sm:$0x1]
        %v243 = vld [vmem:[%s116 + $0x12] sm:$0x1]
        %v244 = vld [vmem:[%s116 + $0x1a] sm:$0x1]
        %v245 = vld [vmem:[%s116 + $0x22] sm:$0x1]
        %v246 = vld [vmem:[%s116 + $0x2a] sm:$0x1]
        %v247 = vld [vmem:[%s116 + $0x32] sm:$0x1]
        %v248 = vld [vmem:[%s116 + $0x3a] sm:$0x1]
        %v249 = vmul.f32 %v233, 0.9
        %v250 = vmul.f32 %v234, 0.9
        %v251 = vmul.f32 %v235, 0.9
        %v252 = vmul.f32 %v236, 0.9
        %v253 = vmul.f32 %v237, 0.9
        %v254 = vmul.f32 %v238, 0.9
        %v255 = vmul.f32 %v239, 0.9
        %v256 = vmul.f32 %v240, 0.9
        %v257 = vadd.f32 %v249, %v241
        %v258 = vadd.f32 %v250, %v242
        %v259 = vadd.f32 %v251, %v243
        %v260 = vadd.f32 %v252, %v244
        %v261 = vadd.f32 %v253, %v245
        %v262 = vadd.f32 %v254, %v246
        %v263 = vadd.f32 %v255, %v247
        %v264 = vadd.f32 %v256, %v248
        %vm265 = vcmp.ge.f32.partialorder %v257, 1.5
        %vm266 = vcmp.ge.f32.partialorder %v258, 1.5
        %vm267 = vcmp.ge.f32.partialorder %v259, 1.5
        %vm268 = vcmp.ge.f32.partialorder %v260, 1.5
        %vm269 = vcmp.ge.f32.partialorder %v261, 1.5
        %vm270 = vcmp.ge.f32.partialorder %v262, 1.5
        %vm271 = vcmp.ge.f32.partialorder %v263, 1.5
        %vm272 = vcmp.ge.f32.partialorder %v264, 1.5
        %v273 = vsel %vm265, 1.0, 0.0
        %v274 = vsel %vm266, 1.0, 0.0
        %v275 = vsel %vm267, 1.0, 0.0
        %v276 = vsel %vm268, 1.0, 0.0
        %v277 = vsel %vm269, 1.0, 0.0
        %v278 = vsel %vm270, 1.0, 0.0
        %v279 = vsel %vm271, 1.0, 0.0
        %v280 = vsel %vm272, 1.0, 0.0
        %281 = vst [vmem:[%s134 + $0x2] sm:$0x1] %v273
        %282 = vst [vmem:[%s134 + $0xa] sm:$0x1] %v274
        %283 = vst [vmem:[%s134 + $0x12] sm:$0x1] %v275
        %284 = vst [vmem:[%s134 + $0x1a] sm:$0x1] %v276
        %285 = vst [vmem:[%s134 + $0x22] sm:$0x1] %v277
        %286 = vst [vmem:[%s134 + $0x2a] sm:$0x1] %v278
        %287 = vst [vmem:[%s134 + $0x32] sm:$0x1] %v279
        %288 = vst [vmem:[%s134 + $0x3a] sm:$0x1] %v280
        %v289 = vsel %vm265, 0.0, %v257
        %v290 = vsel %vm266, 0.0, %v258
        %v291 = vsel %vm267, 0.0, %v259
        %v292 = vsel %vm268, 0.0, %v260
        %v293 = vsel %vm269, 0.0, %v261
        %v294 = vsel %vm270, 0.0, %v262
        %v295 = vsel %vm271, 0.0, %v263
        %v296 = vsel %vm272, 0.0, %v264
        %v297 = vld [vmem:[%s116 + $0x3] sm:$0x1]
        %v298 = vld [vmem:[%s116 + $0xb] sm:$0x1]
        %v299 = vld [vmem:[%s116 + $0x13] sm:$0x1]
        %v300 = vld [vmem:[%s116 + $0x1b] sm:$0x1]
        %v301 = vld [vmem:[%s116 + $0x23] sm:$0x1]
        %v302 = vld [vmem:[%s116 + $0x2b] sm:$0x1]
        %v303 = vld [vmem:[%s116 + $0x33] sm:$0x1]
        %v304 = vld [vmem:[%s116 + $0x3b] sm:$0x1]
        %v305 = vmul.f32 %v289, 0.9
        %v306 = vmul.f32 %v290, 0.9
        %v307 = vmul.f32 %v291, 0.9
        %v308 = vmul.f32 %v292, 0.9
        %v309 = vmul.f32 %v293, 0.9
        %v310 = vmul.f32 %v294, 0.9
        %v311 = vmul.f32 %v295, 0.9
        %v312 = vmul.f32 %v296, 0.9
        %v313 = vadd.f32 %v305, %v297
        %v314 = vadd.f32 %v306, %v298
        %v315 = vadd.f32 %v307, %v299
        %v316 = vadd.f32 %v308, %v300
        %v317 = vadd.f32 %v309, %v301
        %v318 = vadd.f32 %v310, %v302
        %v319 = vadd.f32 %v311, %v303
        %v320 = vadd.f32 %v312, %v304
        %vm321 = vcmp.ge.f32.partialorder %v313, 1.5
        %vm322 = vcmp.ge.f32.partialorder %v314, 1.5
        %vm323 = vcmp.ge.f32.partialorder %v315, 1.5
        %vm324 = vcmp.ge.f32.partialorder %v316, 1.5
        %vm325 = vcmp.ge.f32.partialorder %v317, 1.5
        %vm326 = vcmp.ge.f32.partialorder %v318, 1.5
        %vm327 = vcmp.ge.f32.partialorder %v319, 1.5
        %vm328 = vcmp.ge.f32.partialorder %v320, 1.5
        %v329 = vsel %vm321, 1.0, 0.0
        %v330 = vsel %vm322, 1.0, 0.0
        %v331 = vsel %vm323, 1.0, 0.0
        %v332 = vsel %vm324, 1.0, 0.0
        %v333 = vsel %vm325, 1.0, 0.0
        %v334 = vsel %vm326, 1.0, 0.0
        %v335 = vsel %vm327, 1.0, 0.0
        %v336 = vsel %vm328, 1.0, 0.0
        %337 = vst [vmem:[%s134 + $0x3] sm:$0x1] %v329
        %338 = vst [vmem:[%s134 + $0xb] sm:$0x1] %v330
        %339 = vst [vmem:[%s134 + $0x13] sm:$0x1] %v331
        %340 = vst [vmem:[%s134 + $0x1b] sm:$0x1] %v332
        %341 = vst [vmem:[%s134 + $0x23] sm:$0x1] %v333
        %342 = vst [vmem:[%s134 + $0x2b] sm:$0x1] %v334
        %343 = vst [vmem:[%s134 + $0x33] sm:$0x1] %v335
        %344 = vst [vmem:[%s134 + $0x3b] sm:$0x1] %v336
        %v345 = vsel %vm321, 0.0, %v313
        %v346 = vsel %vm322, 0.0, %v314
        %v347 = vsel %vm323, 0.0, %v315
        %v348 = vsel %vm324, 0.0, %v316
        %v349 = vsel %vm325, 0.0, %v317
        %v350 = vsel %vm326, 0.0, %v318
        %v351 = vsel %vm327, 0.0, %v319
        %v352 = vsel %vm328, 0.0, %v320
        %v353 = vld [vmem:[%s116 + $0x4] sm:$0x1]
        %v354 = vld [vmem:[%s116 + $0xc] sm:$0x1]
        %v355 = vld [vmem:[%s116 + $0x14] sm:$0x1]
        %v356 = vld [vmem:[%s116 + $0x1c] sm:$0x1]
        %v357 = vld [vmem:[%s116 + $0x24] sm:$0x1]
        %v358 = vld [vmem:[%s116 + $0x2c] sm:$0x1]
        %v359 = vld [vmem:[%s116 + $0x34] sm:$0x1]
        %v360 = vld [vmem:[%s116 + $0x3c] sm:$0x1]
        %v361 = vmul.f32 %v345, 0.9
        %v362 = vmul.f32 %v346, 0.9
        %v363 = vmul.f32 %v347, 0.9
        %v364 = vmul.f32 %v348, 0.9
        %v365 = vmul.f32 %v349, 0.9
        %v366 = vmul.f32 %v350, 0.9
        %v367 = vmul.f32 %v351, 0.9
        %v368 = vmul.f32 %v352, 0.9
        %v369 = vadd.f32 %v361, %v353
        %v370 = vadd.f32 %v362, %v354
        %v371 = vadd.f32 %v363, %v355
        %v372 = vadd.f32 %v364, %v356
        %v373 = vadd.f32 %v365, %v357
        %v374 = vadd.f32 %v366, %v358
        %v375 = vadd.f32 %v367, %v359
        %v376 = vadd.f32 %v368, %v360
        %vm377 = vcmp.ge.f32.partialorder %v369, 1.5
        %vm378 = vcmp.ge.f32.partialorder %v370, 1.5
        %vm379 = vcmp.ge.f32.partialorder %v371, 1.5
        %vm380 = vcmp.ge.f32.partialorder %v372, 1.5
        %vm381 = vcmp.ge.f32.partialorder %v373, 1.5
        %vm382 = vcmp.ge.f32.partialorder %v374, 1.5
        %vm383 = vcmp.ge.f32.partialorder %v375, 1.5
        %vm384 = vcmp.ge.f32.partialorder %v376, 1.5
        %v385 = vsel %vm377, 1.0, 0.0
        %v386 = vsel %vm378, 1.0, 0.0
        %v387 = vsel %vm379, 1.0, 0.0
        %v388 = vsel %vm380, 1.0, 0.0
        %v389 = vsel %vm381, 1.0, 0.0
        %v390 = vsel %vm382, 1.0, 0.0
        %v391 = vsel %vm383, 1.0, 0.0
        %v392 = vsel %vm384, 1.0, 0.0
        %393 = vst [vmem:[%s134 + $0x4] sm:$0x1] %v385
        %394 = vst [vmem:[%s134 + $0xc] sm:$0x1] %v386
        %395 = vst [vmem:[%s134 + $0x14] sm:$0x1] %v387
        %396 = vst [vmem:[%s134 + $0x1c] sm:$0x1] %v388
        %397 = vst [vmem:[%s134 + $0x24] sm:$0x1] %v389
        %398 = vst [vmem:[%s134 + $0x2c] sm:$0x1] %v390
        %399 = vst [vmem:[%s134 + $0x34] sm:$0x1] %v391
        %400 = vst [vmem:[%s134 + $0x3c] sm:$0x1] %v392
        %v401 = vsel %vm377, 0.0, %v369
        %v402 = vsel %vm378, 0.0, %v370
        %v403 = vsel %vm379, 0.0, %v371
        %v404 = vsel %vm380, 0.0, %v372
        %v405 = vsel %vm381, 0.0, %v373
        %v406 = vsel %vm382, 0.0, %v374
        %v407 = vsel %vm383, 0.0, %v375
        %v408 = vsel %vm384, 0.0, %v376
        %v409 = vld [vmem:[%s116 + $0x5] sm:$0x1]
        %v410 = vld [vmem:[%s116 + $0xd] sm:$0x1]
        %v411 = vld [vmem:[%s116 + $0x15] sm:$0x1]
        %v412 = vld [vmem:[%s116 + $0x1d] sm:$0x1]
        %v413 = vld [vmem:[%s116 + $0x25] sm:$0x1]
        %v414 = vld [vmem:[%s116 + $0x2d] sm:$0x1]
        %v415 = vld [vmem:[%s116 + $0x35] sm:$0x1]
        %v416 = vld [vmem:[%s116 + $0x3d] sm:$0x1]
        %v417 = vmul.f32 %v401, 0.9
        %v418 = vmul.f32 %v402, 0.9
        %v419 = vmul.f32 %v403, 0.9
        %v420 = vmul.f32 %v404, 0.9
        %v421 = vmul.f32 %v405, 0.9
        %v422 = vmul.f32 %v406, 0.9
        %v423 = vmul.f32 %v407, 0.9
        %v424 = vmul.f32 %v408, 0.9
        %v425 = vadd.f32 %v417, %v409
        %v426 = vadd.f32 %v418, %v410
        %v427 = vadd.f32 %v419, %v411
        %v428 = vadd.f32 %v420, %v412
        %v429 = vadd.f32 %v421, %v413
        %v430 = vadd.f32 %v422, %v414
        %v431 = vadd.f32 %v423, %v415
        %v432 = vadd.f32 %v424, %v416
        %vm433 = vcmp.ge.f32.partialorder %v425, 1.5
        %vm434 = vcmp.ge.f32.partialorder %v426, 1.5
        %vm435 = vcmp.ge.f32.partialorder %v427, 1.5
        %vm436 = vcmp.ge.f32.partialorder %v428, 1.5
        %vm437 = vcmp.ge.f32.partialorder %v429, 1.5
        %vm438 = vcmp.ge.f32.partialorder %v430, 1.5
        %vm439 = vcmp.ge.f32.partialorder %v431, 1.5
        %vm440 = vcmp.ge.f32.partialorder %v432, 1.5
        %v441 = vsel %vm433, 1.0, 0.0
        %v442 = vsel %vm434, 1.0, 0.0
        %v443 = vsel %vm435, 1.0, 0.0
        %v444 = vsel %vm436, 1.0, 0.0
        %v445 = vsel %vm437, 1.0, 0.0
        %v446 = vsel %vm438, 1.0, 0.0
        %v447 = vsel %vm439, 1.0, 0.0
        %v448 = vsel %vm440, 1.0, 0.0
        %449 = vst [vmem:[%s134 + $0x5] sm:$0x1] %v441
        %450 = vst [vmem:[%s134 + $0xd] sm:$0x1] %v442
        %451 = vst [vmem:[%s134 + $0x15] sm:$0x1] %v443
        %452 = vst [vmem:[%s134 + $0x1d] sm:$0x1] %v444
        %453 = vst [vmem:[%s134 + $0x25] sm:$0x1] %v445
        %454 = vst [vmem:[%s134 + $0x2d] sm:$0x1] %v446
        %455 = vst [vmem:[%s134 + $0x35] sm:$0x1] %v447
        %456 = vst [vmem:[%s134 + $0x3d] sm:$0x1] %v448
        %v457 = vsel %vm433, 0.0, %v425
        %v458 = vsel %vm434, 0.0, %v426
        %v459 = vsel %vm435, 0.0, %v427
        %v460 = vsel %vm436, 0.0, %v428
        %v461 = vsel %vm437, 0.0, %v429
        %v462 = vsel %vm438, 0.0, %v430
        %v463 = vsel %vm439, 0.0, %v431
        %v464 = vsel %vm440, 0.0, %v432
        %v465 = vld [vmem:[%s116 + $0x6] sm:$0x1]
        %v466 = vld [vmem:[%s116 + $0xe] sm:$0x1]
        %v467 = vld [vmem:[%s116 + $0x16] sm:$0x1]
        %v468 = vld [vmem:[%s116 + $0x1e] sm:$0x1]
        %v469 = vld [vmem:[%s116 + $0x26] sm:$0x1]
        %v470 = vld [vmem:[%s116 + $0x2e] sm:$0x1]
        %v471 = vld [vmem:[%s116 + $0x36] sm:$0x1]
        %v472 = vld [vmem:[%s116 + $0x3e] sm:$0x1]
        %v473 = vmul.f32 %v457, 0.9
        %v474 = vmul.f32 %v458, 0.9
        %v475 = vmul.f32 %v459, 0.9
        %v476 = vmul.f32 %v460, 0.9
        %v477 = vmul.f32 %v461, 0.9
        %v478 = vmul.f32 %v462, 0.9
        %v479 = vmul.f32 %v463, 0.9
        %v480 = vmul.f32 %v464, 0.9
        %v481 = vadd.f32 %v473, %v465
        %v482 = vadd.f32 %v474, %v466
        %v483 = vadd.f32 %v475, %v467
        %v484 = vadd.f32 %v476, %v468
        %v485 = vadd.f32 %v477, %v469
        %v486 = vadd.f32 %v478, %v470
        %v487 = vadd.f32 %v479, %v471
        %v488 = vadd.f32 %v480, %v472
        %vm489 = vcmp.ge.f32.partialorder %v481, 1.5
        %vm490 = vcmp.ge.f32.partialorder %v482, 1.5
        %vm491 = vcmp.ge.f32.partialorder %v483, 1.5
        %vm492 = vcmp.ge.f32.partialorder %v484, 1.5
        %vm493 = vcmp.ge.f32.partialorder %v485, 1.5
        %vm494 = vcmp.ge.f32.partialorder %v486, 1.5
        %vm495 = vcmp.ge.f32.partialorder %v487, 1.5
        %vm496 = vcmp.ge.f32.partialorder %v488, 1.5
        %v497 = vsel %vm489, 1.0, 0.0
        %v498 = vsel %vm490, 1.0, 0.0
        %v499 = vsel %vm491, 1.0, 0.0
        %v500 = vsel %vm492, 1.0, 0.0
        %v501 = vsel %vm493, 1.0, 0.0
        %v502 = vsel %vm494, 1.0, 0.0
        %v503 = vsel %vm495, 1.0, 0.0
        %v504 = vsel %vm496, 1.0, 0.0
        %505 = vst [vmem:[%s134 + $0x6] sm:$0x1] %v497
        %506 = vst [vmem:[%s134 + $0xe] sm:$0x1] %v498
        %507 = vst [vmem:[%s134 + $0x16] sm:$0x1] %v499
        %508 = vst [vmem:[%s134 + $0x1e] sm:$0x1] %v500
        %509 = vst [vmem:[%s134 + $0x26] sm:$0x1] %v501
        %510 = vst [vmem:[%s134 + $0x2e] sm:$0x1] %v502
        %511 = vst [vmem:[%s134 + $0x36] sm:$0x1] %v503
        %512 = vst [vmem:[%s134 + $0x3e] sm:$0x1] %v504
        %v513 = vsel %vm489, 0.0, %v481
        %v514 = vsel %vm490, 0.0, %v482
        %v515 = vsel %vm491, 0.0, %v483
        %v516 = vsel %vm492, 0.0, %v484
        %v517 = vsel %vm493, 0.0, %v485
        %v518 = vsel %vm494, 0.0, %v486
        %v519 = vsel %vm495, 0.0, %v487
        %v520 = vsel %vm496, 0.0, %v488
        %v521 = vld [vmem:[%s116 + $0x7] sm:$0x1]
        %v522 = vld [vmem:[%s116 + $0xf] sm:$0x1]
        %v523 = vld [vmem:[%s116 + $0x17] sm:$0x1]
        %v524 = vld [vmem:[%s116 + $0x1f] sm:$0x1]
        %v525 = vld [vmem:[%s116 + $0x27] sm:$0x1]
        %v526 = vld [vmem:[%s116 + $0x2f] sm:$0x1]
        %v527 = vld [vmem:[%s116 + $0x37] sm:$0x1]
        %v528 = vld [vmem:[%s116 + $0x3f] sm:$0x1]
        %v529 = vmul.f32 %v513, 0.9
        %v530 = vmul.f32 %v514, 0.9
        %v531 = vmul.f32 %v515, 0.9
        %v532 = vmul.f32 %v516, 0.9
        %v533 = vmul.f32 %v517, 0.9
        %v534 = vmul.f32 %v518, 0.9
        %v535 = vmul.f32 %v519, 0.9
        %v536 = vmul.f32 %v520, 0.9
        %v537 = vadd.f32 %v529, %v521
        %v538 = vadd.f32 %v530, %v522
        %v539 = vadd.f32 %v531, %v523
        %v540 = vadd.f32 %v532, %v524
        %v541 = vadd.f32 %v533, %v525
        %v542 = vadd.f32 %v534, %v526
        %v543 = vadd.f32 %v535, %v527
        %v544 = vadd.f32 %v536, %v528
        %vm545 = vcmp.ge.f32.partialorder %v537, 1.5
        %vm546 = vcmp.ge.f32.partialorder %v538, 1.5
        %vm547 = vcmp.ge.f32.partialorder %v539, 1.5
        %vm548 = vcmp.ge.f32.partialorder %v540, 1.5
        %vm549 = vcmp.ge.f32.partialorder %v541, 1.5
        %vm550 = vcmp.ge.f32.partialorder %v542, 1.5
        %vm551 = vcmp.ge.f32.partialorder %v543, 1.5
        %vm552 = vcmp.ge.f32.partialorder %v544, 1.5
        %v553 = vsel %vm545, 1.0, 0.0
        %v554 = vsel %vm546, 1.0, 0.0
        %v555 = vsel %vm547, 1.0, 0.0
        %v556 = vsel %vm548, 1.0, 0.0
        %v557 = vsel %vm549, 1.0, 0.0
        %v558 = vsel %vm550, 1.0, 0.0
        %v559 = vsel %vm551, 1.0, 0.0
        %v560 = vsel %vm552, 1.0, 0.0
        %561 = vst [vmem:[%s134 + $0x7] sm:$0x1] %v553
        %562 = vst [vmem:[%s134 + $0xf] sm:$0x1] %v554
        %563 = vst [vmem:[%s134 + $0x17] sm:$0x1] %v555
        %564 = vst [vmem:[%s134 + $0x1f] sm:$0x1] %v556
        %565 = vst [vmem:[%s134 + $0x27] sm:$0x1] %v557
        %566 = vst [vmem:[%s134 + $0x2f] sm:$0x1] %v558
        %567 = vst [vmem:[%s134 + $0x37] sm:$0x1] %v559
        %568 = vst [vmem:[%s134 + $0x3f] sm:$0x1] %v560
        %s569 = sand.u32 %s52, 1
        %s570 = scalar_lea.sflag [#allocation4], %s569
        %s571 = sand.u32 %s52, 1
        %s572 = smul.addr %s571, 64
        %s573 = scalar_lea.vmem [#allocation5], %s572
        // Predicated region
        $region29: #{tpu_custom_call.1} parent=23 // pred_check
          %p574 = pneg %p62
        $region30: #{tpu_custom_call.1} parent=23 // pred_check_branch
          %576 = sbr.rel (%p574) target = $region32
        $region31: #{tpu_custom_call.1} parent=23 // pred_region
          %s577 = smul.u32 8, %s18
          %s579 = ssub.s32 1024, 1024
          %580 = vsyncadd %s570, %s579
          %s581 = smul.addr %s577, 128
          %s582 = scalar_lea.hbm %s1, %s581
          %s583 = sshll.u32 %s573, 4
          %s584 = int_to_ptr.vmem [resolvable:$true] %s583
          %589 = dma.vmem_to_hbm [thread:$0]  %s584, 1024, %s582, %s570, 128, 128, 8
        $region32: #{tpu_custom_call.1} parent=23 // pred_fallthru
          _
      $region24: #{tpu_custom_call.1} parent=5 // pred_fallthru
        _
      %p590 = scmp.le.s32.totalorder 2, %s13
      // Predicated region
      $region33: #{tpu_custom_call.1} parent=5 // pred_check
        %p591 = pneg %p590
      $region34: #{tpu_custom_call.1} parent=5 // pred_check_branch
        %593 = sbr.rel (%p591) target = $region36
      $region35: #{tpu_custom_call.1} parent=5 // pred_region
        %s594 = ssub.s32 %s13, 2
        // Predicated region
        $region37: #{tpu_custom_call.1} parent=35 // pred_check
          %p595 = pneg %p68
        $region38: #{tpu_custom_call.1} parent=35 // pred_check_branch
          %597 = sbr.rel (%p595) target = $region40
        $region39: #{tpu_custom_call.1} parent=35 // pred_region
          %s598 = sand.u32 %s53, 1
          %s599 = scalar_lea.sflag [#allocation4], %s598
          %s600 = sand.u32 %s53, 1
          %s601 = smul.addr %s600, 64
          %s602 = scalar_lea.vmem [#allocation5], %s601
          %603 = dma.done %s599, 1024
        $region40: #{tpu_custom_call.1} parent=35 // pred_fallthru
          _
      $region36: #{tpu_custom_call.1} parent=5 // pred_fallthru
        _
    $region6: #{tpu_custom_call.1} parent=1 // loop_footer
      %s17 = sadd.s32 1, %s13
    $region7: #{tpu_custom_call.1} parent=1 // loop_footer_branch
      %12 = sbr.rel target = $region3
    $region8: #{tpu_custom_call.1} parent=1 // loop_exit
      _
    %604 = vsyncpa [#allocation3], 1
    %s605 = scalar_lea.sflag [#allocation3], 1
    %606 = vsyncpa %s605, 1
    %607 = vsyncpa [#allocation4], 1
    %s608 = scalar_lea.sflag [#allocation4], 1
    %609 = vsyncpa %s608, 1

</llo_original>
